<compile_context>
chip_gen: v7x
topology: tpu7x:2x2x1
jax: 0.10.0
libtpu: 0.0.40
codegen_flags: <defaults>
</compile_context>

<pallas_src>
import functools

import jax
import jax.numpy as jnp
from jax.experimental import pallas as pl
from jax.experimental.pallas import tpu as pltpu


def _round_up(x, m):
    return ((x + m - 1) // m) * m


# ---------------------------------------------------------------------------
# Kernel
# ---------------------------------------------------------------------------
def _decoder_kernel(*refs, num_layers, use_sigmoid):
    # refs = (z_ref, w0, b0, w1, b1, ..., w_{L-1}, b_{L-1}, out_ref)
    z_ref = refs[0]
    out_ref = refs[-1]
    params = refs[1:-1]

    # Single cast of the input tile to bf16 for the first MXU matmul.
    x = z_ref[...].astype(jnp.bfloat16)
    for layer in range(num_layers):
        w = params[2 * layer][...]            # bf16 [in_p, out_p] (VMEM-resident)
        b = params[2 * layer + 1][...]        # f32  [1,  out_p]
        y = jnp.dot(x, w, preferred_element_type=jnp.float32) + b
        if layer < num_layers - 1:
            # Fused ReLU + bf16 cast (one pass over the (TB, hidden) tile).
            x = jnp.maximum(y, 0.0).astype(jnp.bfloat16)
        else:
            x = y                             # f32 pre-activation of last layer

    if use_sigmoid:
        # sigmoid(x) = 1 / (1 + exp(-x)); exp and approx reciprocal both go to
        # the EUP slot instead of a VALU divide.
        x = pl.reciprocal(1.0 + jnp.exp(-x), approx=True)

    out_ref[...] = x.astype(out_ref.dtype)


# ---------------------------------------------------------------------------
# One-time host-side parameter preparation (hoisted out of the forward pass)
# ---------------------------------------------------------------------------
def prepare_decoder_params(weights, biases, *, bias):
    """Fold the constant output `bias` into the last Linear bias, zero-pad all
    layer widths up to a multiple of 128 lanes (exact math), store weights as
    bf16 MXU operands and biases as f32.  Call once; reuse across forwards.

    weights: list of [in_i, out_i] f32 (transposed vs. torch nn.Linear.weight)
    biases:  list of [1, out_i] (or [out_i]) f32
    Returns (weights_p, biases_p, x_size).
    """
    assert len(weights) == len(biases)
    num_layers = len(weights)
    x_size = weights[-1].shape[1]

    biases = list(biases)
    if bias is not None:
        biases[-1] = jnp.asarray(biases[-1], jnp.float32) + jnp.float32(bias)

    weights_p, biases_p = [], []
    prev_pad = weights[0].shape[0]            # z_size; K underfill is fine (MXU not the bottleneck)
    for l in range(num_layers):
        w = jnp.asarray(weights[l], jnp.float32)
        b = jnp.asarray(biases[l], jnp.float32).reshape(1, -1)
        in_dim, out_dim = w.shape
        out_pad = _round_up(out_dim, 128)     # lane-dense, incl. the final layer
        w_p = jnp.zeros((prev_pad, out_pad), jnp.float32).at[:in_dim, :out_dim].set(w)
        b_p = jnp.zeros((1, out_pad), jnp.float32).at[:, :out_dim].set(b)
        weights_p.append(w_p.astype(jnp.bfloat16))   # bf16 matmul operands
        biases_p.append(b_p)                         # bias add stays f32
        prev_pad = out_pad
    return tuple(weights_p), tuple(biases_p), x_size


# ---------------------------------------------------------------------------
# Forward wrapper
# ---------------------------------------------------------------------------
def decoder_forward(z, weights_p, biases_p, *, use_sigmoid, x_size=None,
                    block_b=2048, out_dtype=jnp.float32):
    """Fused Decoder forward.  z: [B, z_size] f32; params from prepare_decoder_params."""
    num_layers = len(weights_p)
    B, z_size = z.shape
    x_pad = weights_p[-1].shape[1]
    if x_size is None:
        x_size = x_pad

    # --- balanced batch tiling ----------------------------------------------
    # >=2 steps so the "parallel" batch axis spans both TensorCores on v7x.
    n_steps = max(2, pl.cdiv(B, block_b))
    tb = _round_up(pl.cdiv(B, n_steps), 8)
    n_steps = pl.cdiv(B, tb)                  # drop fully-empty trailing tiles
    # No host-side padding of z: Pallas masks the partial last block.

    kernel = functools.partial(
        _decoder_kernel, num_layers=num_layers, use_sigmoid=use_sigmoid)

    in_specs = [pl.BlockSpec((tb, z_size), lambda i: (i, 0))]
    args = [z]
    for w_p, b_p in zip(weights_p, biases_p):
        # Parameters: full-array blocks, constant index_map -> VMEM-resident.
        in_specs.append(pl.BlockSpec(w_p.shape, lambda i: (0, 0)))
        in_specs.append(pl.BlockSpec(b_p.shape, lambda i: (0, 0)))
        args.append(w_p)
        args.append(b_p)

    # VMEM budget: double-buffered z/out blocks + (double-buffered) params +
    # staged f32 intermediates, with 2x headroom; explicit for v5e's 16 MiB
    # scoped default, clamped for v7x's 64 MiB physical VMEM.
    widths = [w.shape[1] for w in weights_p]
    act_bytes = 4 * tb * (2 * z_size + 2 * x_pad + sum(widths))
    param_bytes = 2 * sum(w.size * 2 + b.size * 4
                          for w, b in zip(weights_p, biases_p))
    vmem_limit = int(min(max(2 * (act_bytes + param_bytes), 16 * 1024 * 1024),
                         48 * 1024 * 1024))

    out = pl.pallas_call(
        kernel,
        grid=(n_steps,),
        out_shape=jax.ShapeDtypeStruct((B, x_pad), out_dtype),
        in_specs=in_specs,
        out_specs=pl.BlockSpec((tb, x_pad), lambda i: (i, 0)),
        compiler_params=pltpu.CompilerParams(
            dimension_semantics=("parallel",),
            vmem_limit_bytes=vmem_limit),
    )(*args)

    return out if x_pad == x_size else out[:, :x_size]


# ---------------------------------------------------------------------------
# Reference / init helpers
# ---------------------------------------------------------------------------
def init_mlp_params(key, in_size, out_sizes):
    """Deterministic init mirroring nn.Linear default (uniform +-1/sqrt(fan_in))."""
    weights, biases = [], []
    in_sizes = [in_size] + out_sizes[:-1]
    for fi, fo in zip(in_sizes, out_sizes):
        key, kw, kb = jax.random.split(key, 3)
        bound = 1.0 / (fi ** 0.5)
        weights.append(jax.random.uniform(kw, (fi, fo), jnp.float32, -bound, bound))
        biases.append(jax.random.uniform(kb, (1, fo), jnp.float32, -bound, bound))
    return weights, biases


def reference_forward(z, weights, biases, *, bias, use_sigmoid):
    x = z
    for i, (w, b) in enumerate(zip(weights, biases)):
        x = x @ w + b
        if i < len(weights) - 1:
            x = jnp.maximum(x, 0.0)
    if bias is not None:
        x = x + bias
    return jax.nn.sigmoid(x) if use_sigmoid else x


if __name__ == "__main__":
    # AIR-style config: z_size=32, h_sizes=[64], x_size=128.
    z_size, h_sizes, x_size = 32, [64], 128
    decoder_bias = -2.0
    use_sigmoid = True

    key = jax.random.PRNGKey(0)
    key, kp = jax.random.split(key)
    weights, biases = init_mlp_params(kp, z_size, h_sizes + [x_size])

    # One-time parameter prep, reused for every forward call.
    weights_p, biases_p, _ = prepare_decoder_params(
        weights, biases, bias=decoder_bias)

    fwd = jax.jit(functools.partial(
        decoder_forward, use_sigmoid=use_sigmoid, x_size=x_size))

    # bf16 MXU operands (f32 accumulate) + approx EUP reciprocal -> bf16-level tol.
    tol = 3e-2

    for B in (8, 600):   # 600 exercises the 2-step grid + ragged (masked) last tile
        key, kz = jax.random.split(key)
        z = jax.random.normal(kz, (B, z_size), jnp.float32)

        out = jax.block_until_ready(fwd(z, weights_p, biases_p))

        ref = reference_forward(z, weights, biases, bias=decoder_bias,
                                use_sigmoid=use_sigmoid)
        assert out.shape == (B, x_size)
        assert jnp.max(jnp.abs(out - ref)) < tol, "mismatch vs reference"

    print("KERNEL_OK")
</pallas_src>

<mosaic_0001>
module attributes {stable_mosaic.version = 11 : i64} {
  func.func @_decoder_kernel(%arg0: i32, %arg1: memref<8x32xf32, #tpu.memory_space<vmem>>, %arg2: memref<32x128xbf16, #tpu.memory_space<vmem>>, %arg3: memref<1x128xf32, #tpu.memory_space<vmem>>, %arg4: memref<128x128xbf16, #tpu.memory_space<vmem>>, %arg5: memref<1x128xf32, #tpu.memory_space<vmem>>, %arg6: memref<8x128xf32, #tpu.memory_space<vmem>>) attributes {dimension_semantics = [#tpu.dimension_semantics<parallel>], iteration_bounds = array<i64: 1>, scalar_prefetch = 0 : i64, scratch_operands = 0 : i64, tpu.core_type = #tpu.core_type<tc>, window_params = [{transform_indices = @transform_0, window_bounds = array<i64: 8, 32>}, {pipeline_mode = #tpu.pipeline_mode<synchronous>, transform_indices = @transform_1, window_bounds = array<i64: 32, 128>}, {pipeline_mode = #tpu.pipeline_mode<synchronous>, transform_indices = @transform_2, window_bounds = array<i64: 1, 128>}, {pipeline_mode = #tpu.pipeline_mode<synchronous>, transform_indices = @transform_3, window_bounds = array<i64: 128, 128>}, {pipeline_mode = #tpu.pipeline_mode<synchronous>, transform_indices = @transform_4, window_bounds = array<i64: 1, 128>}, {transform_indices = @transform_5, window_bounds = array<i64: 8, 128>}]} {
    %c0 = arith.constant 0 : index
    %c0_0 = arith.constant 0 : index
    %0 = vector.load %arg1[%c0, %c0_0] : memref<8x32xf32, #tpu.memory_space<vmem>>, vector<8x32xf32>
    %1 = arith.truncf %0 : vector<8x32xf32> to vector<8x32xbf16>
    %c0_1 = arith.constant 0 : index
    %c0_2 = arith.constant 0 : index
    %2 = vector.load %arg2[%c0_1, %c0_2] : memref<32x128xbf16, #tpu.memory_space<vmem>>, vector<32x128xbf16>
    %c0_3 = arith.constant 0 : index
    %c0_4 = arith.constant 0 : index
    %3 = vector.load %arg3[%c0_3, %c0_4] : memref<1x128xf32, #tpu.memory_space<vmem>>, vector<1x128xf32>
    %cst = arith.constant dense<0.000000e+00> : vector<8x128xf32>
    %4 = tpu.matmul %1, %2, %cst {dimension_numbers = #tpu.dot_dimension_numbers<[1], [0], [0], [1], [0, 0, 1, 1], [], []>} : vector<8x32xbf16>, vector<32x128xbf16>, vector<8x128xf32> -> vector<8x128xf32>
    %5 = vector.broadcast %3 : vector<1x128xf32> to vector<8x128xf32>
    %6 = arith.addf %4, %5 : vector<8x128xf32>
    %cst_5 = arith.constant 0.000000e+00 : f32
    %7 = vector.broadcast %cst_5 : f32 to vector<8x128xf32>
    %8 = arith.maximumf %6, %7 : vector<8x128xf32>
    %9 = arith.truncf %8 : vector<8x128xf32> to vector<8x128xbf16>
    %c0_6 = arith.constant 0 : index
    %c0_7 = arith.constant 0 : index
    %10 = vector.load %arg4[%c0_6, %c0_7] : memref<128x128xbf16, #tpu.memory_space<vmem>>, vector<128x128xbf16>
    %c0_8 = arith.constant 0 : index
    %c0_9 = arith.constant 0 : index
    %11 = vector.load %arg5[%c0_8, %c0_9] : memref<1x128xf32, #tpu.memory_space<vmem>>, vector<1x128xf32>
    %cst_10 = arith.constant dense<0.000000e+00> : vector<8x128xf32>
    %12 = tpu.matmul %9, %10, %cst_10 {dimension_numbers = #tpu.dot_dimension_numbers<[1], [0], [0], [1], [0, 0, 1, 1], [], []>} : vector<8x128xbf16>, vector<128x128xbf16>, vector<8x128xf32> -> vector<8x128xf32>
    %13 = vector.broadcast %11 : vector<1x128xf32> to vector<8x128xf32>
    %14 = arith.addf %12, %13 : vector<8x128xf32>
    %cst_11 = arith.constant 0.000000e+00 : f32
    %15 = vector.broadcast %cst_11 : f32 to vector<8x128xf32>
    %16 = arith.subf %15, %14 : vector<8x128xf32>
    %17 = math.exp %16 : vector<8x128xf32>
    %cst_12 = arith.constant 1.000000e+00 : f32
    %18 = vector.broadcast %cst_12 : f32 to vector<8x128xf32>
    %19 = arith.addf %18, %17 : vector<8x128xf32>
    %20 = tpu.reciprocal %19 {approx = true} : vector<8x128xf32> -> vector<8x128xf32>
    %c0_13 = arith.constant 0 : index
    %c0_14 = arith.constant 0 : index
    %21 = vector.load %arg6[%c0_13, %c0_14] : memref<8x128xf32, #tpu.memory_space<vmem>>, vector<8x128xf32>
    tpu.vector_store %arg6[%c0_13, %c0_14], %20 {strides = array<i32>} : memref<8x128xf32, #tpu.memory_space<vmem>>, vector<8x128xf32>,
    return
  }
  func.func @transform_0(%arg0: i32) -> (i32, i32) {
    %c0_i32 = arith.constant 0 : i32
    %c0_i32_0 = arith.constant 0 : i32
    return %arg0, %c0_i32 : i32, i32
  }
  func.func @transform_1(%arg0: i32) -> (i32, i32) {
    %c0_i32 = arith.constant 0 : i32
    %c0_i32_0 = arith.constant 0 : i32
    %c0_i32_1 = arith.constant 0 : i32
    return %c0_i32, %c0_i32_0 : i32, i32
  }
  func.func @transform_2(%arg0: i32) -> (i32, i32) {
    %c0_i32 = arith.constant 0 : i32
    %c0_i32_0 = arith.constant 0 : i32
    %c0_i32_1 = arith.constant 0 : i32
    return %c0_i32, %c0_i32_0 : i32, i32
  }
  func.func @transform_3(%arg0: i32) -> (i32, i32) {
    %c0_i32 = arith.constant 0 : i32
    %c0_i32_0 = arith.constant 0 : i32
    %c0_i32_1 = arith.constant 0 : i32
    return %c0_i32, %c0_i32_0 : i32, i32
  }
  func.func @transform_4(%arg0: i32) -> (i32, i32) {
    %c0_i32 = arith.constant 0 : i32
    %c0_i32_0 = arith.constant 0 : i32
    %c0_i32_1 = arith.constant 0 : i32
    return %c0_i32, %c0_i32_0 : i32, i32
  }
  func.func @transform_5(%arg0: i32) -> (i32, i32) {
    %c0_i32 = arith.constant 0 : i32
    %c0_i32_0 = arith.constant 0 : i32
    return %arg0, %c0_i32 : i32, i32
  }
}

</mosaic_0001>

<llo_original>
// kernel: decoder_forward.1
$region0: #{decoder_forward.1}
  #allocation0 [shape = 'u32[]', space=smem, size = 0x4, offset = 0x4, fixed_abs, tag = 'smem constant byte address 0x4 - core index']
  #allocation1 [shape = 'u32[144,128]{1,0:T(1,128)}', space=vmem, size = 0x12000, scoped, tag = 'internal scratch']
  %s0 = inlined_call_operand.hbm [shape: f32[8,32], index: 0, kind: input, shape index: {}]
  %s1 = inlined_call_operand.hbm [shape: bf16[32,128], index: 1, kind: input, shape index: {}]
  %s2 = inlined_call_operand.vmem [shape: f32[1,128], index: 2, kind: input, shape index: {}]
  %s3 = inlined_call_operand.hbm [shape: bf16[128,128], index: 3, kind: input, shape index: {}]
  %s4 = inlined_call_operand.vmem [shape: f32[1,128], index: 4, kind: input, shape index: {}]
  %s5 = inlined_call_operand.hbm [shape: f32[8,128], index: 5, kind: output, shape index: {}]
  %s6 = sld [smem:[#allocation0]]
  $region42: #{decoder_forward.1} parent=0
    _
  %s8 = ssub.s32 1, %s6
  %s9 = scalar_select 0, %s8, %s6
  $region1: #{decoder_forward.1} parent=0
    #allocation2 [shape = 'u8[4096]{0}', space=vmem, size = 0x1000, scoped, tag = 'input window, operand 0, single buffered']
    #allocation3 [shape = 's32[1]{0}', space=sflag, size = 0x4, scoped, tag = 'scoped memory for decoder_forward.1']
    #allocation4 [shape = 's32[1]{0}', space=sflag, size = 0x4, scoped, tag = 'scoped memory for decoder_forward.1']
    #allocation5 [shape = 'u8[8192]{0}', space=vmem, size = 0x2000, scoped, tag = 'input window, operand 1, single buffered']
    #allocation6 [shape = 's32[1]{0}', space=sflag, size = 0x4, scoped, tag = 'scoped memory for decoder_forward.1']
    #allocation7 [shape = 'u8[32768]{0}', space=vmem, size = 0x8000, scoped, tag = 'input window, operand 3, single buffered']
    #allocation8 [shape = 'u8[4096]{0}', space=vmem, size = 0x1000, scoped, tag = 'output window, operand 0, single buffered']
    %10 = vsyncpa [#allocation3], 0
    %11 = vsyncpa [#allocation6], 0
    %12 = vsyncpa [#allocation4], 0
    // Predicated region
    $region2: #{decoder_forward.1} parent=1 // pred_check
      _
    $region3: #{decoder_forward.1} parent=1 // pred_check_branch
      %14 = sbr.rel (0) target = $region5
    $region4: #{decoder_forward.1} parent=1 // pred_region
      %s16 = ssub.s32 128, 128
      %17 = vsyncadd [#allocation3], %s16
      %s19 = sshll.u32 [#allocation2], 4
      %s20 = int_to_ptr.vmem [resolvable:$true] %s19
      %22 = dma.hbm_to_vmem [thread:$0]  %s0, 128, %s20, [#allocation3]
    $region5: #{decoder_forward.1} parent=1 // pred_fallthru
      _
    // Predicated region
    $region6: #{decoder_forward.1} parent=1 // pred_check
      _
    $region7: #{decoder_forward.1} parent=1 // pred_check_branch
      %24 = sbr.rel (0) target = $region9
    $region8: #{decoder_forward.1} parent=1 // pred_region
      %s26 = ssub.s32 256, 256
      %27 = vsyncadd [#allocation6], %s26
      %s28 = sshll.u32 [#allocation5], 4
      %s29 = int_to_ptr.vmem [resolvable:$true] %s28
      %34 = dma.hbm_to_vmem [thread:$0]  %s1, 256, %s29, [#allocation6], 64, 64, 4
    $region9: #{decoder_forward.1} parent=1 // pred_fallthru
      _
    // Predicated region
    $region10: #{decoder_forward.1} parent=1 // pred_check
      _
    $region11: #{decoder_forward.1} parent=1 // pred_check_branch
      %36 = sbr.rel (0) target = $region13
    $region12: #{decoder_forward.1} parent=1 // pred_region
      _
    $region13: #{decoder_forward.1} parent=1 // pred_fallthru
      _
    // Predicated region
    $region14: #{decoder_forward.1} parent=1 // pred_check
      _
    $region15: #{decoder_forward.1} parent=1 // pred_check_branch
      %38 = sbr.rel (0) target = $region17
    $region16: #{decoder_forward.1} parent=1 // pred_region
      %s40 = ssub.s32 1024, 1024
      %41 = vsyncadd [#allocation6], %s40
      %s42 = sshll.u32 [#allocation7], 4
      %s43 = int_to_ptr.vmem [resolvable:$true] %s42
      %48 = dma.hbm_to_vmem [thread:$0]  %s3, 1024, %s43, [#allocation6], 64, 64, 4
    $region17: #{decoder_forward.1} parent=1 // pred_fallthru
      _
    // Predicated region
    $region18: #{decoder_forward.1} parent=1 // pred_check
      _
    $region19: #{decoder_forward.1} parent=1 // pred_check_branch
      %50 = sbr.rel (0) target = $region21
    $region20: #{decoder_forward.1} parent=1 // pred_region
      _
    $region21: #{decoder_forward.1} parent=1 // pred_fallthru
      _
    // Predicated region
    $region22: #{decoder_forward.1} parent=1 // pred_check
      _
    $region23: #{decoder_forward.1} parent=1 // pred_check_branch
      %52 = sbr.rel (0) target = $region25
    $region24: #{decoder_forward.1} parent=1 // pred_region
      %53 = dma.done [#allocation3], 128
    $region25: #{decoder_forward.1} parent=1 // pred_fallthru
      _
    // Predicated region
    $region26: #{decoder_forward.1} parent=1 // pred_check
      _
    $region27: #{decoder_forward.1} parent=1 // pred_check_branch
      %55 = sbr.rel (0) target = $region29
    $region28: #{decoder_forward.1} parent=1 // pred_region
      %56 = dma.done [#allocation6], 256
    $region29: #{decoder_forward.1} parent=1 // pred_fallthru
      _
    // Predicated region
    $region30: #{decoder_forward.1} parent=1 // pred_check
      _
    $region31: #{decoder_forward.1} parent=1 // pred_check_branch
      %58 = sbr.rel (0) target = $region33
    $region32: #{decoder_forward.1} parent=1 // pred_region
      %59 = dma.done [#allocation6], 1024
    $region33: #{decoder_forward.1} parent=1 // pred_fallthru
      _
    %v61 = vld [vmem:[#allocation2] sm:$0xff]
    %v62 = vpack.c.bf16 %v61, %v61
    %v63 = vld [vmem:[#allocation5] sm:$0xf]
    %v64 = vld [vmem:[#allocation5 + $0x4] sm:$0xf]
    %v65 = vld [vmem:[#allocation5 + $0x8] sm:$0xf]
    %v66 = vld [vmem:[#allocation5 + $0xc] sm:$0xf]
    %v67 = vld [vmem:[%s2] sm:$0x1]
    %v69 = vlaneseq
    %v70 = vshrl.u32 %v69, 7
    %v71 = vsub.s32 0, %v70
    %v72 = vrot.slane %v67, %v71
    %v78 = vunpack.c.l.b16 %v63
    %v79 = vunpack.c.l.b16 %v64
    %v80 = vunpack.c.l.b16 %v65
    %v81 = vunpack.c.l.b16 %v66
    %v82 = vpack.c.b16 %v79, %v78
    %v83 = vpack.c.b16 %v81, %v80
    %vm86 = vcmask 261120
    %v88 = vsel %vm86, %v62, 0
    %90 = vmatprep.subr.bf16.mxu0 0
    %91 = vmatpush1.bf16.msra.mxu0 %v82
    %92 = vmatprep.subr.bf16.mxu0 0
    %93 = vmatpush1.bf16.msra.mxu0 %v83
    %94 = vmatprep.subr.bf16.mxu0 0
    %95 = vmatpush1.bf16.msra.mxu0 0
    %96 = vmatprep.subr.bf16.mxu0 0
    %97 = vmatpush1.bf16.msra.mxu0 0
    %98 = vmatprep.subr.bf16.mxu0 0
    %99 = vmatpush1.bf16.msra.mxu0 0
    %100 = vmatprep.subr.bf16.mxu0 0
    %101 = vmatpush1.bf16.msra.mxu0 0
    %102 = vmatprep.subr.bf16.mxu0 0
    %103 = vmatpush1.bf16.msra.mxu0 0
    %104 = vmatprep.subr.bf16.mxu0 0
    %105 = vmatpush1.bf16.msra.mxu0 0
    %106 = vmatprep.subr.bf16.mxu0 0
    %107 = vmatpush1.bf16.msra.mxu0 0
    %108 = vmatprep.subr.bf16.mxu0 0
    %109 = vmatpush1.bf16.msra.mxu0 0
    %110 = vmatprep.subr.bf16.mxu0 0
    %111 = vmatpush1.bf16.msra.mxu0 0
    %112 = vmatprep.subr.bf16.mxu0 0
    %113 = vmatpush1.bf16.msra.mxu0 0
    %114 = vmatprep.subr.bf16.mxu0 0
    %115 = vmatpush1.bf16.msra.mxu0 0
    %116 = vmatprep.subr.bf16.mxu0 0
    %117 = vmatpush1.bf16.msra.mxu0 0
    %118 = vmatprep.subr.bf16.mxu0 0
    %119 = vmatpush1.bf16.msra.mxu0 0
    %120 = vmatprep.subr.bf16.mxu0 0
    %121 = vmatpush1.bf16.msra.mxu0 0
    %122 = vmatprep.mubr.bf16.mxu0 0
    %123 = vmatmul.mubr.bf16.gmra.mrb[0].mxu0 %v88
    %v124 = vpop.f32.mrb[0].mxu0
    %v125 = vadd.f32 %v72, %v124
    %v126 = vpop.f32.mrb[0].mxu0
    %v127 = vpop.f32.mrb[0].mxu0
    %v128 = vpop.f32.mrb[0].mxu0
    %129 = vdwg.mxu0
    %v130 = vmax.f32 %v125, 0.0
    %v131 = vpack.c.bf16 %v130, %v130
    %v132 = vld [vmem:[#allocation7] sm:$0xf]
    %v133 = vld [vmem:[#allocation7 + $0x4] sm:$0xf]
    %v134 = vld [vmem:[#allocation7 + $0x8] sm:$0xf]
    %v135 = vld [vmem:[#allocation7 + $0xc] sm:$0xf]
    %v136 = vld [vmem:[#allocation7 + $0x10] sm:$0xf]
    %v137 = vld [vmem:[#allocation7 + $0x14] sm:$0xf]
    %v138 = vld [vmem:[#allocation7 + $0x18] sm:$0xf]
    %v139 = vld [vmem:[#allocation7 + $0x1c] sm:$0xf]
    %v140 = vld [vmem:[#allocation7 + $0x20] sm:$0xf]
    %v141 = vld [vmem:[#allocation7 + $0x24] sm:$0xf]
    %v142 = vld [vmem:[#allocation7 + $0x28] sm:$0xf]
    %v143 = vld [vmem:[#allocation7 + $0x2c] sm:$0xf]
    %v144 = vld [vmem:[#allocation7 + $0x30] sm:$0xf]
    %v145 = vld [vmem:[#allocation7 + $0x34] sm:$0xf]
    %v146 = vld [vmem:[#allocation7 + $0x38] sm:$0xf]
    %v147 = vld [vmem:[#allocation7 + $0x3c] sm:$0xf]
    %v148 = vld [vmem:[%s4] sm:$0x1]
    %v150 = vlaneseq
    %v151 = vshrl.u32 %v150, 7
    %v152 = vsub.s32 0, %v151
    %v153 = vrot.slane %v148, %v152
    %v171 = vunpack.c.l.b16 %v132
    %v172 = vunpack.c.l.b16 %v133
    %v173 = vunpack.c.l.b16 %v134
    %v174 = vunpack.c.l.b16 %v135
    %v175 = vunpack.c.l.b16 %v136
    %v176 = vunpack.c.l.b16 %v137
    %v177 = vunpack.c.l.b16 %v138
    %v178 = vunpack.c.l.b16 %v139
    %v179 = vunpack.c.l.b16 %v140
    %v180 = vunpack.c.l.b16 %v141
    %v181 = vunpack.c.l.b16 %v142
    %v182 = vunpack.c.l.b16 %v143
    %v183 = vunpack.c.l.b16 %v144
    %v184 = vunpack.c.l.b16 %v145
    %v185 = vunpack.c.l.b16 %v146
    %v186 = vunpack.c.l.b16 %v147
    %v187 = vpack.c.b16 %v172, %v171
    %v188 = vpack.c.b16 %v174, %v173
    %v189 = vpack.c.b16 %v176, %v175
    %v190 = vpack.c.b16 %v178, %v177
    %v191 = vpack.c.b16 %v180, %v179
    %v192 = vpack.c.b16 %v182, %v181
    %v193 = vpack.c.b16 %v184, %v183
    %v194 = vpack.c.b16 %v186, %v185
    %203 = vmatprep.subr.bf16.mxu0 0
    %204 = vmatpush1.bf16.msra.mxu0 %v187
    %205 = vmatprep.subr.bf16.mxu0 0
    %206 = vmatpush1.bf16.msra.mxu0 %v188
    %207 = vmatprep.subr.bf16.mxu0 0
    %208 = vmatpush1.bf16.msra.mxu0 %v189
    %209 = vmatprep.subr.bf16.mxu0 0
    %210 = vmatpush1.bf16.msra.mxu0 %v190
    %211 = vmatprep.subr.bf16.mxu0 0
    %212 = vmatpush1.bf16.msra.mxu0 %v191
    %213 = vmatprep.subr.bf16.mxu0 0
    %214 = vmatpush1.bf16.msra.mxu0 %v192
    %215 = vmatprep.subr.bf16.mxu0 0
    %216 = vmatpush1.bf16.msra.mxu0 %v193
    %217 = vmatprep.subr.bf16.mxu0 0
    %218 = vmatpush1.bf16.msra.mxu0 %v194
    %219 = vmatprep.subr.bf16.mxu0 0
    %220 = vmatpush1.bf16.msra.mxu0 0
    %221 = vmatprep.subr.bf16.mxu0 0
    %222 = vmatpush1.bf16.msra.mxu0 0
    %223 = vmatprep.subr.bf16.mxu0 0
    %224 = vmatpush1.bf16.msra.mxu0 0
    %225 = vmatprep.subr.bf16.mxu0 0
    %226 = vmatpush1.bf16.msra.mxu0 0
    %227 = vmatprep.subr.bf16.mxu0 0
    %228 = vmatpush1.bf16.msra.mxu0 0
    %229 = vmatprep.subr.bf16.mxu0 0
    %230 = vmatpush1.bf16.msra.mxu0 0
    %231 = vmatprep.subr.bf16.mxu0 0
    %232 = vmatpush1.bf16.msra.mxu0 0
    %233 = vmatprep.subr.bf16.mxu0 0
    %234 = vmatpush1.bf16.msra.mxu0 0
    %235 = vmatprep.mubr.bf16.mxu0 0
    %236 = vmatmul.mubr.bf16.gmra.mrb[0].mxu0 %v131
    %v237 = vpop.f32.mrb[0].mxu0
    %v238 = vadd.f32 %v153, %v237
    %v239 = vpop.f32.mrb[0].mxu0
    %v240 = vpop.f32.mrb[0].mxu0
    %v241 = vpop.f32.mrb[0].mxu0
    %242 = vdwg.mxu0
    %v243 = vsub.f32 0.0, %v238
    %v244 = vmul.f32 %v243, 1.442695
    %v245 = vpow.pop %v244
    %v246 = vadd.f32 %v245, 1.0
    %v247 = vrcp.pop %v246
    %248 = vst [vmem:[#allocation8] sm:$0xff] %v247
    // Predicated region
    $region34: #{decoder_forward.1} parent=1 // pred_check
      _
    $region35: #{decoder_forward.1} parent=1 // pred_check_branch
      %250 = sbr.rel (0) target = $region37
    $region36: #{decoder_forward.1} parent=1 // pred_region
      %s252 = ssub.s32 128, 128
      %253 = vsyncadd [#allocation4], %s252
      %s255 = sshll.u32 [#allocation8], 4
      %s256 = int_to_ptr.vmem [resolvable:$true] %s255
      %258 = dma.vmem_to_hbm [thread:$0]  %s256, 128, %s5, [#allocation4]
    $region37: #{decoder_forward.1} parent=1 // pred_fallthru
      _
    // Predicated region
    $region38: #{decoder_forward.1} parent=1 // pred_check
      _
    $region39: #{decoder_forward.1} parent=1 // pred_check_branch
      %260 = sbr.rel (0) target = $region41
    $region40: #{decoder_forward.1} parent=1 // pred_region
      %261 = dma.done [#allocation4], 128
    $region41: #{decoder_forward.1} parent=1 // pred_fallthru
      _
    %262 = vsyncpa [#allocation3], 1
    %263 = vsyncpa [#allocation6], 1
    %264 = vsyncpa [#allocation4], 1

</llo_original>
